<compile_context>
chip_gen: v6e
topology: v6e:2x2x1
jax: 0.10.0
libtpu: 0.0.40
codegen_flags: <defaults>
</compile_context>

<pallas_src>
import math

import jax
import jax.numpy as jnp
from jax.experimental import pallas as pl
from jax.experimental.pallas import tpu as pltpu


def _gelu_tanh(x):
    # F.gelu(x, approximate='tanh')
    c = math.sqrt(2.0 / math.pi)
    return 0.5 * x * (1.0 + jnp.tanh(c * (x + 0.044715 * x * x * x)))


def ffn_kernel(x_ref, w1_ref, b1_ref, w2_ref, b2_ref, o_ref, acc_ref):
    # x_ref:  (tm, D)  bf16 row tile
    # w1_ref: (D, ti)  bf16 slice of layer1 weight (transposed vs torch)
    # b1_ref: (1, ti)  f32 slice of layer1 bias
    # w2_ref: (ti, D)  bf16 slice of layer2 weight (transposed vs torch)
    # b2_ref: (1, D)   f32 layer2 bias
    # o_ref:  (tm, D)  output tile (x.dtype)
    # acc_ref:(tm, D)  f32 accumulator (resident across the I axis)
    k = pl.program_id(1)

    @pl.when(k == 0)
    def _():
        acc_ref[...] = jnp.zeros_like(acc_ref)

    # Layer 1 partial: bf16 x bf16 -> f32 on the MXU, bias + GELU in f32.
    h = jnp.dot(x_ref[...], w1_ref[...], preferred_element_type=jnp.float32)
    h = _gelu_tanh(h + b1_ref[...])

    # Layer 2 partial: cast activations to bf16 for the MXU, accumulate f32.
    acc_ref[...] += jnp.dot(h.astype(w2_ref.dtype), w2_ref[...],
                            preferred_element_type=jnp.float32)

    @pl.when(k == pl.num_programs(1) - 1)
    def _():
        o_ref[...] = (acc_ref[...] + b2_ref[...]).astype(o_ref.dtype)


def _pick_ti(I, ti_max):
    """Largest multiple-of-128 divisor of I that is <= ti_max (else full I)."""
    if I <= 128 or I % 128 != 0:
        return I
    best = 128
    t = 128
    while t <= min(ti_max, I):
        if I % t == 0:
            best = t
        t += 128
    return best


def feed_forward(x, w1, b1, w2, b2, *, tm=256, ti_max=512):
    """x: (B, S, D). w1: (D, I), b1: (I,), w2: (I, D), b2: (D,)."""
    B, S, D = x.shape
    I = w1.shape[1]
    N = B * S
    assert tm % 8 == 0, "row tile must be a multiple of 8 sublanes"

    x2d = x.reshape(N, D)

    # Pad rows to a multiple of tm (no divisibility requirement on B*S).
    n_pad = pl.cdiv(N, tm) * tm
    if n_pad != N:
        x2d = jnp.pad(x2d, ((0, n_pad - N), (0, 0)))

    ti = _pick_ti(I, ti_max)

    # bf16 operands for the MXU; biases stay f32.
    xb = x2d.astype(jnp.bfloat16)
    w1b = w1.astype(jnp.bfloat16)
    w2b = w2.astype(jnp.bfloat16)
    b1r = b1.reshape(1, I).astype(jnp.float32)
    b2r = b2.reshape(1, D).astype(jnp.float32)

    grid = (n_pad // tm, I // ti)

    # Rough per-step VMEM footprint (double-buffered tiles + f32 accumulator).
    tile_bytes = (
        2 * tm * D * 2          # x tile (bf16)
        + 2 * D * ti * 2        # w1 tile (bf16)
        + 2 * ti * D * 2        # w2 tile (bf16)
        + 2 * ti * 4 + 2 * D * 4  # biases (f32)
        + 2 * tm * D * 4        # out tile (f32)
        + tm * D * 4            # accumulator scratch (f32)
    )
    vmem_limit = int(min(64 * 1024 * 1024, max(32 * 1024 * 1024, 2 * tile_bytes)))

    cost = pl.CostEstimate(
        flops=4 * n_pad * D * I,            # two matmuls
        transcendentals=n_pad * I,          # tanh in GELU
        bytes_accessed=(xb.size * 2 + w1b.size * 2 + w2b.size * 2
                        + b1r.size * 4 + b2r.size * 4 + n_pad * D * 4),
    )

    out2d = pl.pallas_call(
        ffn_kernel,
        out_shape=jax.ShapeDtypeStruct((n_pad, D), x.dtype),
        grid_spec=pltpu.PrefetchScalarGridSpec(
            num_scalar_prefetch=0,
            grid=grid,
            in_specs=[
                pl.BlockSpec((tm, D), lambda i, k: (i, 0)),   # x rows
                pl.BlockSpec((D, ti), lambda i, k: (0, k)),   # w1 slice
                pl.BlockSpec((1, ti), lambda i, k: (0, k)),   # b1 slice
                pl.BlockSpec((ti, D), lambda i, k: (k, 0)),   # w2 slice
                pl.BlockSpec((1, D), lambda i, k: (0, 0)),    # b2
            ],
            out_specs=pl.BlockSpec((tm, D), lambda i, k: (i, 0)),
            scratch_shapes=[pltpu.VMEM((tm, D), jnp.float32)],
        ),
        compiler_params=pltpu.CompilerParams(
            dimension_semantics=("parallel", "arbitrary"),
            vmem_limit_bytes=vmem_limit,
        ),
        cost_estimate=cost,
    )(xb, w1b, b1r, w2b, b2r)

    return out2d[:N].reshape(B, S, D)


if __name__ == "__main__":
    # Small shapes consistent with the module: embedding_dimension=32.
    B, S, D = 2, 64, 32
    I = 4 * D  # intermediate_dimension

    key = jax.random.PRNGKey(0)
    kx, k1, k2, k3, k4 = jax.random.split(key, 5)

    # Same shapes as the torch module, stored transposed:
    # torch layer1.weight is (I, D) -> here w1 is (D, I).
    x = jax.random.normal(kx, (B, S, D), dtype=jnp.float32)
    w1 = jax.random.normal(k1, (D, I), dtype=jnp.float32) * (1.0 / math.sqrt(D))
    b1 = jax.random.normal(k2, (I,), dtype=jnp.float32) * 0.01
    w2 = jax.random.normal(k3, (I, D), dtype=jnp.float32) * (1.0 / math.sqrt(I))
    b2 = jax.random.normal(k4, (D,), dtype=jnp.float32) * 0.01

    out = feed_forward(x, w1, b1, w2, b2)
    out = jax.block_until_ready(out)
    assert out.shape == (B, S, D)

    # Reference 1: same bf16-operand / f32-accumulate math in plain JAX.
    xb = x.astype(jnp.bfloat16)
    h_ref = jnp.dot(xb.reshape(B * S, D), w1.astype(jnp.bfloat16),
                    preferred_element_type=jnp.float32) + b1
    h_ref = _gelu_tanh(h_ref)
    ref_bf16 = (jnp.dot(h_ref.astype(jnp.bfloat16), w2.astype(jnp.bfloat16),
                        preferred_element_type=jnp.float32) + b2).reshape(B, S, D)
    assert jnp.allclose(out, ref_bf16, atol=1e-2, rtol=1e-2)

    # Reference 2 (sanity): full f32 math, loose tolerance for bf16 operands.
    ref_f32 = _gelu_tanh(x @ w1 + b1) @ w2 + b2
    assert jnp.allclose(out, ref_f32, atol=5e-2, rtol=5e-2)

    print("KERNEL_OK")
</pallas_src>

<mosaic_0001>
module attributes {stable_mosaic.version = 11 : i64} {
  func.func @ffn_kernel(%arg0: i32, %arg1: i32, %arg2: memref<256x32xbf16, #tpu.memory_space<vmem>>, %arg3: memref<32x128xbf16, #tpu.memory_space<vmem>>, %arg4: memref<1x128xf32, #tpu.memory_space<vmem>>, %arg5: memref<128x32xbf16, #tpu.memory_space<vmem>>, %arg6: memref<1x32xf32, #tpu.memory_space<vmem>>, %arg7: memref<256x32xf32, #tpu.memory_space<vmem>>, %arg8: memref<256x32xf32, #tpu.memory_space<vmem>>) attributes {dimension_semantics = [#tpu.dimension_semantics<parallel>, #tpu.dimension_semantics<arbitrary>], iteration_bounds = array<i64: 1, 1>, scalar_prefetch = 0 : i64, scratch_operands = 1 : i64, tpu.core_type = #tpu.core_type<tc>, window_params = [{transform_indices = @transform_0, window_bounds = array<i64: 256, 32>}, {transform_indices = @transform_1, window_bounds = array<i64: 32, 128>}, {transform_indices = @transform_2, window_bounds = array<i64: 1, 128>}, {transform_indices = @transform_3, window_bounds = array<i64: 128, 32>}, {pipeline_mode = #tpu.pipeline_mode<synchronous>, transform_indices = @transform_4, window_bounds = array<i64: 1, 32>}, {transform_indices = @transform_5, window_bounds = array<i64: 256, 32>}]} {
    %c0_i32 = arith.constant 0 : i32
    %0 = arith.cmpi eq, %arg1, %c0_i32 : i32
    %1 = arith.extui %0 : i1 to i32
    %c0_i32_0 = arith.constant 0 : i32
    %2 = arith.cmpi ne, %1, %c0_i32_0 : i32
    scf.if %2 {
      %cst_19 = arith.constant 0.000000e+00 : f32
      %31 = vector.broadcast %cst_19 : f32 to vector<256x32xf32>
      %c0_20 = arith.constant 0 : index
      %c0_21 = arith.constant 0 : index
      %32 = vector.load %arg8[%c0_20, %c0_21] : memref<256x32xf32, #tpu.memory_space<vmem>>, vector<256x32xf32>
      tpu.vector_store %arg8[%c0_20, %c0_21], %31 {strides = array<i32>} : memref<256x32xf32, #tpu.memory_space<vmem>>, vector<256x32xf32>,
    } else {
    }
    %c0 = arith.constant 0 : index
    %c0_1 = arith.constant 0 : index
    %3 = vector.load %arg2[%c0, %c0_1] : memref<256x32xbf16, #tpu.memory_space<vmem>>, vector<256x32xbf16>
    %c0_2 = arith.constant 0 : index
    %c0_3 = arith.constant 0 : index
    %4 = vector.load %arg3[%c0_2, %c0_3] : memref<32x128xbf16, #tpu.memory_space<vmem>>, vector<32x128xbf16>
    %cst = arith.constant dense<0.000000e+00> : vector<256x128xf32>
    %5 = tpu.matmul %3, %4, %cst {dimension_numbers = #tpu.dot_dimension_numbers<[1], [0], [0], [1], [0, 0, 1, 1], [], []>} : vector<256x32xbf16>, vector<32x128xbf16>, vector<256x128xf32> -> vector<256x128xf32>
    %c0_4 = arith.constant 0 : index
    %c0_5 = arith.constant 0 : index
    %6 = vector.load %arg4[%c0_4, %c0_5] : memref<1x128xf32, #tpu.memory_space<vmem>>, vector<1x128xf32>
    %7 = vector.broadcast %6 : vector<1x128xf32> to vector<256x128xf32>
    %8 = arith.addf %5, %7 : vector<256x128xf32>
    %cst_6 = arith.constant 5.000000e-01 : f32
    %9 = vector.broadcast %cst_6 : f32 to vector<256x128xf32>
    %10 = arith.mulf %9, %8 : vector<256x128xf32>
    %cst_7 = arith.constant 4.471500e-02 : f32
    %11 = vector.broadcast %cst_7 : f32 to vector<256x128xf32>
    %12 = arith.mulf %11, %8 : vector<256x128xf32>
    %13 = arith.mulf %12, %8 : vector<256x128xf32>
    %14 = arith.mulf %13, %8 : vector<256x128xf32>
    %15 = arith.addf %8, %14 : vector<256x128xf32>
    %cst_8 = arith.constant 0.797884583 : f32
    %16 = vector.broadcast %cst_8 : f32 to vector<256x128xf32>
    %17 = arith.mulf %16, %15 : vector<256x128xf32>
    %18 = math.tanh %17 : vector<256x128xf32>
    %cst_9 = arith.constant 1.000000e+00 : f32
    %19 = vector.broadcast %cst_9 : f32 to vector<256x128xf32>
    %20 = arith.addf %19, %18 : vector<256x128xf32>
    %21 = arith.mulf %10, %20 : vector<256x128xf32>
    %c0_10 = arith.constant 0 : index
    %c0_11 = arith.constant 0 : index
    %22 = vector.load %arg8[%c0_10, %c0_11] : memref<256x32xf32, #tpu.memory_space<vmem>>, vector<256x32xf32>
    %23 = arith.truncf %21 : vector<256x128xf32> to vector<256x128xbf16>
    %c0_12 = arith.constant 0 : index
    %c0_13 = arith.constant 0 : index
    %24 = vector.load %arg5[%c0_12, %c0_13] : memref<128x32xbf16, #tpu.memory_space<vmem>>, vector<128x32xbf16>
    %cst_14 = arith.constant dense<0.000000e+00> : vector<256x32xf32>
    %25 = tpu.matmul %23, %24, %cst_14 {dimension_numbers = #tpu.dot_dimension_numbers<[1], [0], [0], [1], [0, 0, 1, 1], [], []>} : vector<256x128xbf16>, vector<128x32xbf16>, vector<256x32xf32> -> vector<256x32xf32>
    %26 = arith.addf %22, %25 : vector<256x32xf32>
    %c0_15 = arith.constant 0 : index
    %c0_16 = arith.constant 0 : index
    %27 = vector.load %arg8[%c0_15, %c0_16] : memref<256x32xf32, #tpu.memory_space<vmem>>, vector<256x32xf32>
    tpu.vector_store %arg8[%c0_15, %c0_16], %26 {strides = array<i32>} : memref<256x32xf32, #tpu.memory_space<vmem>>, vector<256x32xf32>,
    %c0_i32_17 = arith.constant 0 : i32
    %28 = arith.cmpi eq, %arg1, %c0_i32_17 : i32
    %29 = arith.extui %28 : i1 to i32
    %c0_i32_18 = arith.constant 0 : i32
    %30 = arith.cmpi ne, %29, %c0_i32_18 : i32
    scf.if %30 {
      %c0_19 = arith.constant 0 : index
      %c0_20 = arith.constant 0 : index
      %31 = vector.load %arg8[%c0_19, %c0_20] : memref<256x32xf32, #tpu.memory_space<vmem>>, vector<256x32xf32>
      %c0_21 = arith.constant 0 : index
      %c0_22 = arith.constant 0 : index
      %32 = vector.load %arg6[%c0_21, %c0_22] : memref<1x32xf32, #tpu.memory_space<vmem>>, vector<1x32xf32>
      %33 = vector.broadcast %32 : vector<1x32xf32> to vector<256x32xf32>
      %34 = arith.addf %31, %33 : vector<256x32xf32>
      %c0_23 = arith.constant 0 : index
      %c0_24 = arith.constant 0 : index
      %35 = vector.load %arg7[%c0_23, %c0_24] : memref<256x32xf32, #tpu.memory_space<vmem>>, vector<256x32xf32>
      tpu.vector_store %arg7[%c0_23, %c0_24], %34 {strides = array<i32>} : memref<256x32xf32, #tpu.memory_space<vmem>>, vector<256x32xf32>,
    } else {
    }
    return
  }
  func.func @transform_0(%arg0: i32, %arg1: i32) -> (i32, i32) {
    %c0_i32 = arith.constant 0 : i32
    %c0_i32_0 = arith.constant 0 : i32
    return %arg0, %c0_i32 : i32, i32
  }
  func.func @transform_1(%arg0: i32, %arg1: i32) -> (i32, i32) {
    %c0_i32 = arith.constant 0 : i32
    %c0_i32_0 = arith.constant 0 : i32
    return %c0_i32, %arg1 : i32, i32
  }
  func.func @transform_2(%arg0: i32, %arg1: i32) -> (i32, i32) {
    %c0_i32 = arith.constant 0 : i32
    %c0_i32_0 = arith.constant 0 : i32
    return %c0_i32, %arg1 : i32, i32
  }
  func.func @transform_3(%arg0: i32, %arg1: i32) -> (i32, i32) {
    %c0_i32 = arith.constant 0 : i32
    %c0_i32_0 = arith.constant 0 : i32
    return %arg1, %c0_i32 : i32, i32
  }
  func.func @transform_4(%arg0: i32, %arg1: i32) -> (i32, i32) {
    %c0_i32 = arith.constant 0 : i32
    %c0_i32_0 = arith.constant 0 : i32
    %c0_i32_1 = arith.constant 0 : i32
    return %c0_i32, %c0_i32_0 : i32, i32
  }
  func.func @transform_5(%arg0: i32, %arg1: i32) -> (i32, i32) {
    %c0_i32 = arith.constant 0 : i32
    %c0_i32_0 = arith.constant 0 : i32
    return %arg0, %c0_i32 : i32, i32
  }
}

</mosaic_0001>

<llo_original>
// kernel: tpu_custom_call.1
$region0: #{tpu_custom_call.1}
  #allocation0 [shape = 'u32[]', space=smem, size = 0x4, offset = 0x4, fixed_abs, tag = 'smem constant byte address 0x4 - core index']
  #allocation1 [shape = 'u32[144,128]{1,0:T(1,128)}', space=vmem, size = 0x12000, scoped, tag = 'internal scratch']
  #allocation2 [shape = 'f32[256,32]{1,0:T(8,128)}', space=vmem, size = 0x20000, scoped, tag = 'scratch operand']
  %s0 = inlined_call_operand.vmem [shape: bf16[256,32], index: 0, kind: input, shape index: {}]
  %s1 = inlined_call_operand.vmem [shape: bf16[32,128], index: 1, kind: input, shape index: {}]
  %s2 = inlined_call_operand.vmem [shape: f32[1,128], index: 2, kind: input, shape index: {}]
  %s3 = inlined_call_operand.vmem [shape: bf16[128,32], index: 3, kind: input, shape index: {}]
  %s4 = inlined_call_operand.vmem [shape: f32[1,32], index: 4, kind: input, shape index: {}]
  %s5 = inlined_call_operand.vmem [shape: f32[256,32], index: 5, kind: output, shape index: {}]
  %s6 = sld [smem:[#allocation0]]
  $region38: #{tpu_custom_call.1} parent=0
    _
  %s8 = ssub.s32 1, %s6
  %s9 = scalar_select 0, %s8, %s6
  // Predicated region
  $region2: #{tpu_custom_call.1} parent=0 // pred_check
    _
  $region3: #{tpu_custom_call.1} parent=0 // pred_check_branch
    %11 = sbr.rel (0) target = $region5
  $region4: #{tpu_custom_call.1} parent=0 // pred_region
    _
  $region5: #{tpu_custom_call.1} parent=0 // pred_fallthru
    _
  // Predicated region
  $region6: #{tpu_custom_call.1} parent=0 // pred_check
    _
  $region7: #{tpu_custom_call.1} parent=0 // pred_check_branch
    %13 = sbr.rel (0) target = $region9
  $region8: #{tpu_custom_call.1} parent=0 // pred_region
    _
  $region9: #{tpu_custom_call.1} parent=0 // pred_fallthru
    _
  // Predicated region
  $region10: #{tpu_custom_call.1} parent=0 // pred_check
    _
  $region11: #{tpu_custom_call.1} parent=0 // pred_check_branch
    %15 = sbr.rel (0) target = $region13
  $region12: #{tpu_custom_call.1} parent=0 // pred_region
    _
  $region13: #{tpu_custom_call.1} parent=0 // pred_fallthru
    _
  // Predicated region
  $region14: #{tpu_custom_call.1} parent=0 // pred_check
    _
  $region15: #{tpu_custom_call.1} parent=0 // pred_check_branch
    %17 = sbr.rel (0) target = $region17
  $region16: #{tpu_custom_call.1} parent=0 // pred_region
    _
  $region17: #{tpu_custom_call.1} parent=0 // pred_fallthru
    _
  // Predicated region
  $region18: #{tpu_custom_call.1} parent=0 // pred_check
    _
  $region19: #{tpu_custom_call.1} parent=0 // pred_check_branch
    %19 = sbr.rel (0) target = $region21
  $region20: #{tpu_custom_call.1} parent=0 // pred_region
    _
  $region21: #{tpu_custom_call.1} parent=0 // pred_fallthru
    _
  %p21 = scmp.eq.s32.totalorder 0, 0
  // Predicated region
  $region22: #{tpu_custom_call.1} parent=0 // pred_check
    %p22 = pneg %p21
  $region23: #{tpu_custom_call.1} parent=0 // pred_check_branch
    %24 = sbr.rel (%p22) target = $region25
  $region24: #{tpu_custom_call.1} parent=0 // pred_region
    %vm25 = vcmask 261120
    %26 = vst.msk [vmem:[#allocation2] sm:$0xff] %vm25, 0.0
    %27 = vst.msk [vmem:[#allocation2 + $0x8] sm:$0xff] %vm25, 0.0
    %28 = vst.msk [vmem:[#allocation2 + $0x10] sm:$0xff] %vm25, 0.0
    %29 = vst.msk [vmem:[#allocation2 + $0x18] sm:$0xff] %vm25, 0.0
    %30 = vst.msk [vmem:[#allocation2 + $0x20] sm:$0xff] %vm25, 0.0
    %31 = vst.msk [vmem:[#allocation2 + $0x28] sm:$0xff] %vm25, 0.0
    %32 = vst.msk [vmem:[#allocation2 + $0x30] sm:$0xff] %vm25, 0.0
    %33 = vst.msk [vmem:[#allocation2 + $0x38] sm:$0xff] %vm25, 0.0
    %34 = vst.msk [vmem:[#allocation2 + $0x40] sm:$0xff] %vm25, 0.0
    %35 = vst.msk [vmem:[#allocation2 + $0x48] sm:$0xff] %vm25, 0.0
    %36 = vst.msk [vmem:[#allocation2 + $0x50] sm:$0xff] %vm25, 0.0
    %37 = vst.msk [vmem:[#allocation2 + $0x58] sm:$0xff] %vm25, 0.0
    %38 = vst.msk [vmem:[#allocation2 + $0x60] sm:$0xff] %vm25, 0.0
    %39 = vst.msk [vmem:[#allocation2 + $0x68] sm:$0xff] %vm25, 0.0
    %40 = vst.msk [vmem:[#allocation2 + $0x70] sm:$0xff] %vm25, 0.0
    %41 = vst.msk [vmem:[#allocation2 + $0x78] sm:$0xff] %vm25, 0.0
    %42 = vst.msk [vmem:[#allocation2 + $0x80] sm:$0xff] %vm25, 0.0
    %43 = vst.msk [vmem:[#allocation2 + $0x88] sm:$0xff] %vm25, 0.0
    %44 = vst.msk [vmem:[#allocation2 + $0x90] sm:$0xff] %vm25, 0.0
    %45 = vst.msk [vmem:[#allocation2 + $0x98] sm:$0xff] %vm25, 0.0
    %46 = vst.msk [vmem:[#allocation2 + $0xa0] sm:$0xff] %vm25, 0.0
    %47 = vst.msk [vmem:[#allocation2 + $0xa8] sm:$0xff] %vm25, 0.0
    %48 = vst.msk [vmem:[#allocation2 + $0xb0] sm:$0xff] %vm25, 0.0
    %49 = vst.msk [vmem:[#allocation2 + $0xb8] sm:$0xff] %vm25, 0.0
    %50 = vst.msk [vmem:[#allocation2 + $0xc0] sm:$0xff] %vm25, 0.0
    %51 = vst.msk [vmem:[#allocation2 + $0xc8] sm:$0xff] %vm25, 0.0
    %52 = vst.msk [vmem:[#allocation2 + $0xd0] sm:$0xff] %vm25, 0.0
    %53 = vst.msk [vmem:[#allocation2 + $0xd8] sm:$0xff] %vm25, 0.0
    %54 = vst.msk [vmem:[#allocation2 + $0xe0] sm:$0xff] %vm25, 0.0
    %55 = vst.msk [vmem:[#allocation2 + $0xe8] sm:$0xff] %vm25, 0.0
    %56 = vst.msk [vmem:[#allocation2 + $0xf0] sm:$0xff] %vm25, 0.0
    %57 = vst.msk [vmem:[#allocation2 + $0xf8] sm:$0xff] %vm25, 0.0
  $region25: #{tpu_custom_call.1} parent=0 // pred_fallthru
    _
  %v58 = vld [vmem:[%s0] sm:$0xf]
  %v59 = vld [vmem:[%s0 + $0x4] sm:$0xf]
  %v60 = vld [vmem:[%s0 + $0x8] sm:$0xf]
  %v61 = vld [vmem:[%s0 + $0xc] sm:$0xf]
  %v62 = vld [vmem:[%s0 + $0x10] sm:$0xf]
  %v63 = vld [vmem:[%s0 + $0x14] sm:$0xf]
  %v64 = vld [vmem:[%s0 + $0x18] sm:$0xf]
  %v65 = vld [vmem:[%s0 + $0x1c] sm:$0xf]
  %v66 = vld [vmem:[%s0 + $0x20] sm:$0xf]
  %v67 = vld [vmem:[%s0 + $0x24] sm:$0xf]
  %v68 = vld [vmem:[%s0 + $0x28] sm:$0xf]
  %v69 = vld [vmem:[%s0 + $0x2c] sm:$0xf]
  %v70 = vld [vmem:[%s0 + $0x30] sm:$0xf]
  %v71 = vld [vmem:[%s0 + $0x34] sm:$0xf]
  %v72 = vld [vmem:[%s0 + $0x38] sm:$0xf]
  %v73 = vld [vmem:[%s0 + $0x3c] sm:$0xf]
  %v74 = vld [vmem:[%s0 + $0x40] sm:$0xf]
  %v75 = vld [vmem:[%s0 + $0x44] sm:$0xf]
  %v76 = vld [vmem:[%s0 + $0x48] sm:$0xf]
  %v77 = vld [vmem:[%s0 + $0x4c] sm:$0xf]
  %v78 = vld [vmem:[%s0 + $0x50] sm:$0xf]
  %v79 = vld [vmem:[%s0 + $0x54] sm:$0xf]
  %v80 = vld [vmem:[%s0 + $0x58] sm:$0xf]
  %v81 = vld [vmem:[%s0 + $0x5c] sm:$0xf]
  %v82 = vld [vmem:[%s0 + $0x60] sm:$0xf]
  %v83 = vld [vmem:[%s0 + $0x64] sm:$0xf]
  %v84 = vld [vmem:[%s0 + $0x68] sm:$0xf]
  %v85 = vld [vmem:[%s0 + $0x6c] sm:$0xf]
  %v86 = vld [vmem:[%s0 + $0x70] sm:$0xf]
  %v87 = vld [vmem:[%s0 + $0x74] sm:$0xf]
  %v88 = vld [vmem:[%s0 + $0x78] sm:$0xf]
  %v89 = vld [vmem:[%s0 + $0x7c] sm:$0xf]
  %v90 = vld [vmem:[%s1] sm:$0xf]
  %v91 = vld [vmem:[%s1 + $0x4] sm:$0xf]
  %v92 = vld [vmem:[%s1 + $0x8] sm:$0xf]
  %v93 = vld [vmem:[%s1 + $0xc] sm:$0xf]
  %v94 = vld [vmem:[%s2] sm:$0x1]
  %v96 = vlaneseq
  %v97 = vshrl.u32 %v96, 7
  %v98 = vsub.s32 0, %v97
  %v99 = vrot.slane %v94, %v98
  %v133 = vunpack.c.l.b16 %v58
  %v134 = vunpack.c.l.b16 %v59
  %v135 = vunpack.c.l.b16 %v60
  %v136 = vunpack.c.l.b16 %v61
  %v137 = vunpack.c.l.b16 %v62
  %v138 = vunpack.c.l.b16 %v63
  %v139 = vunpack.c.l.b16 %v64
  %v140 = vunpack.c.l.b16 %v65
  %v141 = vunpack.c.l.b16 %v66
  %v142 = vunpack.c.l.b16 %v67
  %v143 = vunpack.c.l.b16 %v68
  %v144 = vunpack.c.l.b16 %v69
  %v145 = vunpack.c.l.b16 %v70
  %v146 = vunpack.c.l.b16 %v71
  %v147 = vunpack.c.l.b16 %v72
  %v148 = vunpack.c.l.b16 %v73
  %v149 = vunpack.c.l.b16 %v74
  %v150 = vunpack.c.l.b16 %v75
  %v151 = vunpack.c.l.b16 %v76
  %v152 = vunpack.c.l.b16 %v77
  %v153 = vunpack.c.l.b16 %v78
  %v154 = vunpack.c.l.b16 %v79
  %v155 = vunpack.c.l.b16 %v80
  %v156 = vunpack.c.l.b16 %v81
  %v157 = vunpack.c.l.b16 %v82
  %v158 = vunpack.c.l.b16 %v83
  %v159 = vunpack.c.l.b16 %v84
  %v160 = vunpack.c.l.b16 %v85
  %v161 = vunpack.c.l.b16 %v86
  %v162 = vunpack.c.l.b16 %v87
  %v163 = vunpack.c.l.b16 %v88
  %v164 = vunpack.c.l.b16 %v89
  %v165 = vpack.c.b16 %v134, %v133
  %v166 = vpack.c.b16 %v136, %v135
  %v167 = vpack.c.b16 %v138, %v137
  %v168 = vpack.c.b16 %v140, %v139
  %v169 = vpack.c.b16 %v142, %v141
  %v170 = vpack.c.b16 %v144, %v143
  %v171 = vpack.c.b16 %v146, %v145
  %v172 = vpack.c.b16 %v148, %v147
  %v173 = vpack.c.b16 %v150, %v149
  %v174 = vpack.c.b16 %v152, %v151
  %v175 = vpack.c.b16 %v154, %v153
  %v176 = vpack.c.b16 %v156, %v155
  %v177 = vpack.c.b16 %v158, %v157
  %v178 = vpack.c.b16 %v160, %v159
  %v179 = vpack.c.b16 %v162, %v161
  %v180 = vpack.c.b16 %v164, %v163
  %v185 = vunpack.c.l.b16 %v90
  %v186 = vunpack.c.l.b16 %v91
  %v187 = vunpack.c.l.b16 %v92
  %v188 = vunpack.c.l.b16 %v93
  %v189 = vpack.c.b16 %v186, %v185
  %v190 = vpack.c.b16 %v188, %v187
  %vm193 = vcmask 261120
  %v195 = vsel %vm193, %v165, 0
  %v198 = vsel %vm193, %v166, 0
  %v201 = vsel %vm193, %v167, 0
  %v204 = vsel %vm193, %v168, 0
  %v207 = vsel %vm193, %v169, 0
  %v210 = vsel %vm193, %v170, 0
  %v213 = vsel %vm193, %v171, 0
  %v216 = vsel %vm193, %v172, 0
  %v219 = vsel %vm193, %v173, 0
  %v222 = vsel %vm193, %v174, 0
  %v225 = vsel %vm193, %v175, 0
  %v228 = vsel %vm193, %v176, 0
  %v231 = vsel %vm193, %v177, 0
  %v234 = vsel %vm193, %v178, 0
  %v237 = vsel %vm193, %v179, 0
  %v240 = vsel %vm193, %v180, 0
  %242 = vmatprep.subr.bf16.mxu0 0
  %243 = vmatpush1.bf16.msra.mxu0 0
  %244 = vmatprep.subr.bf16.mxu0 0
  %245 = vmatpush1.bf16.msra.mxu0 0
  %246 = vmatprep.subr.bf16.mxu0 0
  %247 = vmatpush1.bf16.msra.mxu0 0
  %248 = vmatprep.subr.bf16.mxu0 0
  %249 = vmatpush1.bf16.msra.mxu0 0
  %250 = vmatprep.subr.bf16.mxu0 0
  %251 = vmatpush1.bf16.msra.mxu0 0
  %252 = vmatprep.subr.bf16.mxu0 0
  %253 = vmatpush1.bf16.msra.mxu0 0
  %254 = vmatprep.subr.bf16.mxu0 0
  %255 = vmatpush1.bf16.msra.mxu0 %v190
  %256 = vmatprep.subr.bf16.mxu0 0
  %257 = vmatpush1.bf16.msra.mxu0 %v189
  %258 = vmatprep.subr.bf16.mxu0 0
  %259 = vmatpush2.bf16.msra.mxu0 0
  %260 = vmatprep.subr.bf16.mxu0 0
  %261 = vmatpush2.bf16.msra.mxu0 0
  %262 = vmatprep.subr.bf16.mxu0 0
  %263 = vmatpush2.bf16.msra.mxu0 0
  %264 = vmatprep.subr.bf16.mxu0 0
  %265 = vmatpush2.bf16.msra.mxu0 0
  %266 = vmatprep.subr.bf16.mxu0 0
  %267 = vmatpush2.bf16.msra.mxu0 0
  %268 = vmatprep.subr.bf16.mxu0 0
  %269 = vmatpush2.bf16.msra.mxu0 0
  %270 = vmatprep.subr.bf16.mxu0 0
  %271 = vmatpush2.bf16.msra.mxu0 0
  %272 = vmatprep.subr.bf16.mxu0 0
  %273 = vmatpush2.bf16.msra.mxu0 0
  %274 = vmatprep.mubr.bf16.mxu0 0
  %275 = vmatmul.mubr.bf16.gmra.mxu0 %v195
  %v276 = vpop.f32.mrf.mxu0
  %v277 = vadd.f32 %v99, %v276
  %v278 = vpop.f32.mrf.mxu0
  %v279 = vpop.f32.mrf.mxu0
  %v280 = vadd.f32 %v99, %v279
  %v281 = vpop.f32.mrf.mxu0
  %282 = vmatprep.mubr.bf16.mxu0 0
  %283 = vmatmul.mubr.bf16.gmra.mxu0 %v198
  %v284 = vpop.f32.mrf.mxu0
  %v285 = vadd.f32 %v99, %v284
  %v286 = vpop.f32.mrf.mxu0
  %v287 = vpop.f32.mrf.mxu0
  %v288 = vadd.f32 %v99, %v287
  %v289 = vpop.f32.mrf.mxu0
  %290 = vmatprep.mubr.bf16.mxu0 0
  %291 = vmatmul.mubr.bf16.gmra.mxu0 %v201
  %v292 = vpop.f32.mrf.mxu0
  %v293 = vadd.f32 %v99, %v292
  %v294 = vpop.f32.mrf.mxu0
  %v295 = vpop.f32.mrf.mxu0
  %v296 = vadd.f32 %v99, %v295
  %v297 = vpop.f32.mrf.mxu0
  %298 = vmatprep.mubr.bf16.mxu0 0
  %299 = vmatmul.mubr.bf16.gmra.mxu0 %v204
  %v300 = vpop.f32.mrf.mxu0
  %v301 = vadd.f32 %v99, %v300
  %v302 = vpop.f32.mrf.mxu0
  %v303 = vpop.f32.mrf.mxu0
  %v304 = vadd.f32 %v99, %v303
  %v305 = vpop.f32.mrf.mxu0
  %306 = vmatprep.mubr.bf16.mxu0 0
  %307 = vmatmul.mubr.bf16.gmra.mxu0 %v207
  %v308 = vpop.f32.mrf.mxu0
  %v309 = vadd.f32 %v99, %v308
  %v310 = vpop.f32.mrf.mxu0
  %v311 = vpop.f32.mrf.mxu0
  %v312 = vadd.f32 %v99, %v311
  %v313 = vpop.f32.mrf.mxu0
  %314 = vmatprep.mubr.bf16.mxu0 0
  %315 = vmatmul.mubr.bf16.gmra.mxu0 %v210
  %v316 = vpop.f32.mrf.mxu0
  %v317 = vadd.f32 %v99, %v316
  %v318 = vpop.f32.mrf.mxu0
  %v319 = vpop.f32.mrf.mxu0
  %v320 = vadd.f32 %v99, %v319
  %v321 = vpop.f32.mrf.mxu0
  %322 = vmatprep.mubr.bf16.mxu0 0
  %323 = vmatmul.mubr.bf16.gmra.mxu0 %v213
  %v324 = vpop.f32.mrf.mxu0
  %v325 = vadd.f32 %v99, %v324
  %v326 = vpop.f32.mrf.mxu0
  %v327 = vpop.f32.mrf.mxu0
  %v328 = vadd.f32 %v99, %v327
  %v329 = vpop.f32.mrf.mxu0
  %330 = vmatprep.mubr.bf16.mxu0 0
  %331 = vmatmul.mubr.bf16.gmra.mxu0 %v216
  %v332 = vpop.f32.mrf.mxu0
  %v333 = vadd.f32 %v99, %v332
  %v334 = vpop.f32.mrf.mxu0
  %v335 = vpop.f32.mrf.mxu0
  %v336 = vadd.f32 %v99, %v335
  %v337 = vpop.f32.mrf.mxu0
  %338 = vmatprep.mubr.bf16.mxu0 0
  %339 = vmatmul.mubr.bf16.gmra.mxu0 %v219
  %v340 = vpop.f32.mrf.mxu0
  %v341 = vadd.f32 %v99, %v340
  %v342 = vpop.f32.mrf.mxu0
  %v343 = vpop.f32.mrf.mxu0
  %v344 = vadd.f32 %v99, %v343
  %v345 = vpop.f32.mrf.mxu0
  %346 = vmatprep.mubr.bf16.mxu0 0
  %347 = vmatmul.mubr.bf16.gmra.mxu0 %v222
  %v348 = vpop.f32.mrf.mxu0
  %v349 = vadd.f32 %v99, %v348
  %v350 = vpop.f32.mrf.mxu0
  %v351 = vpop.f32.mrf.mxu0
  %v352 = vadd.f32 %v99, %v351
  %v353 = vpop.f32.mrf.mxu0
  %354 = vmatprep.mubr.bf16.mxu0 0
  %355 = vmatmul.mubr.bf16.gmra.mxu0 %v225
  %v356 = vpop.f32.mrf.mxu0
  %v357 = vadd.f32 %v99, %v356
  %v358 = vpop.f32.mrf.mxu0
  %v359 = vpop.f32.mrf.mxu0
  %v360 = vadd.f32 %v99, %v359
  %v361 = vpop.f32.mrf.mxu0
  %362 = vmatprep.mubr.bf16.mxu0 0
  %363 = vmatmul.mubr.bf16.gmra.mxu0 %v228
  %v364 = vpop.f32.mrf.mxu0
  %v365 = vadd.f32 %v99, %v364
  %v366 = vpop.f32.mrf.mxu0
  %v367 = vpop.f32.mrf.mxu0
  %v368 = vadd.f32 %v99, %v367
  %v369 = vpop.f32.mrf.mxu0
  %370 = vmatprep.mubr.bf16.mxu0 0
  %371 = vmatmul.mubr.bf16.gmra.mxu0 %v231
  %v372 = vpop.f32.mrf.mxu0
  %v373 = vadd.f32 %v99, %v372
  %v374 = vpop.f32.mrf.mxu0
  %v375 = vpop.f32.mrf.mxu0
  %v376 = vadd.f32 %v99, %v375
  %v377 = vpop.f32.mrf.mxu0
  %378 = vmatprep.mubr.bf16.mxu0 0
  %379 = vmatmul.mubr.bf16.gmra.mxu0 %v234
  %v380 = vpop.f32.mrf.mxu0
  %v381 = vadd.f32 %v99, %v380
  %v382 = vpop.f32.mrf.mxu0
  %v383 = vpop.f32.mrf.mxu0
  %v384 = vadd.f32 %v99, %v383
  %v385 = vpop.f32.mrf.mxu0
  %386 = vmatprep.mubr.bf16.mxu0 0
  %387 = vmatmul.mubr.bf16.gmra.mxu0 %v237
  %v388 = vpop.f32.mrf.mxu0
  %v389 = vadd.f32 %v99, %v388
  %v390 = vpop.f32.mrf.mxu0
  %v391 = vpop.f32.mrf.mxu0
  %v392 = vadd.f32 %v99, %v391
  %v393 = vpop.f32.mrf.mxu0
  %394 = vmatprep.mubr.bf16.mxu0 0
  %395 = vmatmul.mubr.bf16.gmra.mxu0 %v240
  %v396 = vpop.f32.mrf.mxu0
  %v397 = vadd.f32 %v99, %v396
  %v398 = vpop.f32.mrf.mxu0
  %v399 = vpop.f32.mrf.mxu0
  %v400 = vadd.f32 %v99, %v399
  %v401 = vpop.f32.mrf.mxu0
  %402 = vdwg.mxu0
  %v403 = vmul.f32 %v277, 0.5
  %v404 = vmul.f32 %v280, 0.5
  %v405 = vmul.f32 %v285, 0.5
  %v406 = vmul.f32 %v288, 0.5
  %v407 = vmul.f32 %v293, 0.5
  %v408 = vmul.f32 %v296, 0.5
  %v409 = vmul.f32 %v301, 0.5
  %v410 = vmul.f32 %v304, 0.5
  %v411 = vmul.f32 %v309, 0.5
  %v412 = vmul.f32 %v312, 0.5
  %v413 = vmul.f32 %v317, 0.5
  %v414 = vmul.f32 %v320, 0.5
  %v415 = vmul.f32 %v325, 0.5
  %v416 = vmul.f32 %v328, 0.5
  %v417 = vmul.f32 %v333, 0.5
  %v418 = vmul.f32 %v336, 0.5
  %v419 = vmul.f32 %v341, 0.5
  %v420 = vmul.f32 %v344, 0.5
  %v421 = vmul.f32 %v349, 0.5
  %v422 = vmul.f32 %v352, 0.5
  %v423 = vmul.f32 %v357, 0.5
  %v424 = vmul.f32 %v360, 0.5
  %v425 = vmul.f32 %v365, 0.5
  %v426 = vmul.f32 %v368, 0.5
  %v427 = vmul.f32 %v373, 0.5
  %v428 = vmul.f32 %v376, 0.5
  %v429 = vmul.f32 %v381, 0.5
  %v430 = vmul.f32 %v384, 0.5
  %v431 = vmul.f32 %v389, 0.5
  %v432 = vmul.f32 %v392, 0.5
  %v433 = vmul.f32 %v397, 0.5
  %v434 = vmul.f32 %v400, 0.5
  %v435 = vmul.f32 %v277, 0.044715
  %v436 = vmul.f32 %v280, 0.044715
  %v437 = vmul.f32 %v285, 0.044715
  %v438 = vmul.f32 %v288, 0.044715
  %v439 = vmul.f32 %v293, 0.044715
  %v440 = vmul.f32 %v296, 0.044715
  %v441 = vmul.f32 %v301, 0.044715
  %v442 = vmul.f32 %v304, 0.044715
  %v443 = vmul.f32 %v309, 0.044715
  %v444 = vmul.f32 %v312, 0.044715
  %v445 = vmul.f32 %v317, 0.044715
  %v446 = vmul.f32 %v320, 0.044715
  %v447 = vmul.f32 %v325, 0.044715
  %v448 = vmul.f32 %v328, 0.044715
  %v449 = vmul.f32 %v333, 0.044715
  %v450 = vmul.f32 %v336, 0.044715
  %v451 = vmul.f32 %v341, 0.044715
  %v452 = vmul.f32 %v344, 0.044715
  %v453 = vmul.f32 %v349, 0.044715
  %v454 = vmul.f32 %v352, 0.044715
  %v455 = vmul.f32 %v357, 0.044715
  %v456 = vmul.f32 %v360, 0.044715
  %v457 = vmul.f32 %v365, 0.044715
  %v458 = vmul.f32 %v368, 0.044715
  %v459 = vmul.f32 %v373, 0.044715
  %v460 = vmul.f32 %v376, 0.044715
  %v461 = vmul.f32 %v381, 0.044715
  %v462 = vmul.f32 %v384, 0.044715
  %v463 = vmul.f32 %v389, 0.044715
  %v464 = vmul.f32 %v392, 0.044715
  %v465 = vmul.f32 %v397, 0.044715
  %v466 = vmul.f32 %v400, 0.044715
  %v467 = vmul.f32 %v435, %v277
  %v468 = vmul.f32 %v436, %v280
  %v469 = vmul.f32 %v437, %v285
  %v470 = vmul.f32 %v438, %v288
  %v471 = vmul.f32 %v439, %v293
  %v472 = vmul.f32 %v440, %v296
  %v473 = vmul.f32 %v441, %v301
  %v474 = vmul.f32 %v442, %v304
  %v475 = vmul.f32 %v443, %v309
  %v476 = vmul.f32 %v444, %v312
  %v477 = vmul.f32 %v445, %v317
  %v478 = vmul.f32 %v446, %v320
  %v479 = vmul.f32 %v447, %v325
  %v480 = vmul.f32 %v448, %v328
  %v481 = vmul.f32 %v449, %v333
  %v482 = vmul.f32 %v450, %v336
  %v483 = vmul.f32 %v451, %v341
  %v484 = vmul.f32 %v452, %v344
  %v485 = vmul.f32 %v453, %v349
  %v486 = vmul.f32 %v454, %v352
  %v487 = vmul.f32 %v455, %v357
  %v488 = vmul.f32 %v456, %v360
  %v489 = vmul.f32 %v457, %v365
  %v490 = vmul.f32 %v458, %v368
  %v491 = vmul.f32 %v459, %v373
  %v492 = vmul.f32 %v460, %v376
  %v493 = vmul.f32 %v461, %v381
  %v494 = vmul.f32 %v462, %v384
  %v495 = vmul.f32 %v463, %v389
  %v496 = vmul.f32 %v464, %v392
  %v497 = vmul.f32 %v465, %v397
  %v498 = vmul.f32 %v466, %v400
  %v499 = vmul.f32 %v467, %v277
  %v500 = vmul.f32 %v468, %v280
  %v501 = vmul.f32 %v469, %v285
  %v502 = vmul.f32 %v470, %v288
  %v503 = vmul.f32 %v471, %v293
  %v504 = vmul.f32 %v472, %v296
  %v505 = vmul.f32 %v473, %v301
  %v506 = vmul.f32 %v474, %v304
  %v507 = vmul.f32 %v475, %v309
  %v508 = vmul.f32 %v476, %v312
  %v509 = vmul.f32 %v477, %v317
  %v510 = vmul.f32 %v478, %v320
  %v511 = vmul.f32 %v479, %v325
  %v512 = vmul.f32 %v480, %v328
  %v513 = vmul.f32 %v481, %v333
  %v514 = vmul.f32 %v482, %v336
  %v515 = vmul.f32 %v483, %v341
  %v516 = vmul.f32 %v484, %v344
  %v517 = vmul.f32 %v485, %v349
  %v518 = vmul.f32 %v486, %v352
  %v519 = vmul.f32 %v487, %v357
  %v520 = vmul.f32 %v488, %v360
  %v521 = vmul.f32 %v489, %v365
  %v522 = vmul.f32 %v490, %v368
  %v523 = vmul.f32 %v491, %v373
  %v524 = vmul.f32 %v492, %v376
  %v525 = vmul.f32 %v493, %v381
  %v526 = vmul.f32 %v494, %v384
  %v527 = vmul.f32 %v495, %v389
  %v528 = vmul.f32 %v496, %v392
  %v529 = vmul.f32 %v497, %v397
  %v530 = vmul.f32 %v498, %v400
  %v531 = vadd.f32 %v277, %v499
  %v532 = vadd.f32 %v280, %v500
  %v533 = vadd.f32 %v285, %v501
  %v534 = vadd.f32 %v288, %v502
  %v535 = vadd.f32 %v293, %v503
  %v536 = vadd.f32 %v296, %v504
  %v537 = vadd.f32 %v301, %v505
  %v538 = vadd.f32 %v304, %v506
  %v539 = vadd.f32 %v309, %v507
  %v540 = vadd.f32 %v312, %v508
  %v541 = vadd.f32 %v317, %v509
  %v542 = vadd.f32 %v320, %v510
  %v543 = vadd.f32 %v325, %v511
  %v544 = vadd.f32 %v328, %v512
  %v545 = vadd.f32 %v333, %v513
  %v546 = vadd.f32 %v336, %v514
  %v547 = vadd.f32 %v341, %v515
  %v548 = vadd.f32 %v344, %v516
  %v549 = vadd.f32 %v349, %v517
  %v550 = vadd.f32 %v352, %v518
  %v551 = vadd.f32 %v357, %v519
  %v552 = vadd.f32 %v360, %v520
  %v553 = vadd.f32 %v365, %v521
  %v554 = vadd.f32 %v368, %v522
  %v555 = vadd.f32 %v373, %v523
  %v556 = vadd.f32 %v376, %v524
  %v557 = vadd.f32 %v381, %v525
  %v558 = vadd.f32 %v384, %v526
  %v559 = vadd.f32 %v389, %v527
  %v560 = vadd.f32 %v392, %v528
  %v561 = vadd.f32 %v397, %v529
  %v562 = vadd.f32 %v400, %v530
  %v563 = vmul.f32 %v531, 0.7978846
  %v564 = vmul.f32 %v532, 0.7978846
  %v565 = vmul.f32 %v533, 0.7978846
  %v566 = vmul.f32 %v534, 0.7978846
  %v567 = vmul.f32 %v535, 0.7978846
  %v568 = vmul.f32 %v536, 0.7978846
  %v569 = vmul.f32 %v537, 0.7978846
  %v570 = vmul.f32 %v538, 0.7978846
  %v571 = vmul.f32 %v539, 0.7978846
  %v572 = vmul.f32 %v540, 0.7978846
  %v573 = vmul.f32 %v541, 0.7978846
  %v574 = vmul.f32 %v542, 0.7978846
  %v575 = vmul.f32 %v543, 0.7978846
  %v576 = vmul.f32 %v544, 0.7978846
  %v577 = vmul.f32 %v545, 0.7978846
  %v578 = vmul.f32 %v546, 0.7978846
  %v579 = vmul.f32 %v547, 0.7978846
  %v580 = vmul.f32 %v548, 0.7978846
  %v581 = vmul.f32 %v549, 0.7978846
  %v582 = vmul.f32 %v550, 0.7978846
  %v583 = vmul.f32 %v551, 0.7978846
  %v584 = vmul.f32 %v552, 0.7978846
  %v585 = vmul.f32 %v553, 0.7978846
  %v586 = vmul.f32 %v554, 0.7978846
  %v587 = vmul.f32 %v555, 0.7978846
  %v588 = vmul.f32 %v556, 0.7978846
  %v589 = vmul.f32 %v557, 0.7978846
  %v590 = vmul.f32 %v558, 0.7978846
  %v591 = vmul.f32 %v559, 0.7978846
  %v592 = vmul.f32 %v560, 0.7978846
  %v593 = vmul.f32 %v561, 0.7978846
  %v594 = vmul.f32 %v562, 0.7978846
  %v595 = vtanh.pop %v563
  %v596 = vtanh.pop %v564
  %v597 = vtanh.pop %v565
  %v598 = vtanh.pop %v566
  %v599 = vtanh.pop %v567
  %v600 = vtanh.pop %v568
  %v601 = vtanh.pop %v569
  %v602 = vtanh.pop %v570
  %v603 = vtanh.pop %v571
  %v604 = vtanh.pop %v572
  %v605 = vtanh.pop %v573
  %v606 = vtanh.pop %v574
  %v607 = vtanh.pop %v575
  %v608 = vtanh.pop %v576
  %v609 = vtanh.pop %v577
  %v610 = vtanh.pop %v578
  %v611 = vtanh.pop %v579
  %v612 = vtanh.pop %v580
  %v613 = vtanh.pop %v581
  %v614 = vtanh.pop %v582
  %v615 = vtanh.pop %v583
  %v616 = vtanh.pop %v584
  %v617 = vtanh.pop %v585
  %v618 = vtanh.pop %v586
  %v619 = vtanh.pop %v587
  %v620 = vtanh.pop %v588
  %v621 = vtanh.pop %v589
  %v622 = vtanh.pop %v590
  %v623 = vtanh.pop %v591
  %v624 = vtanh.pop %v592
  %v625 = vtanh.pop %v593
  %v626 = vtanh.pop %v594
  %v627 = vadd.f32 %v595, 1.0
  %v628 = vadd.f32 %v596, 1.0
  %v629 = vadd.f32 %v597, 1.0
  %v630 = vadd.f32 %v598, 1.0
  %v631 = vadd.f32 %v599, 1.0
  %v632 = vadd.f32 %v600, 1.0
  %v633 = vadd.f32 %v601, 1.0
  %v634 = vadd.f32 %v602, 1.0
  %v635 = vadd.f32 %v603, 1.0
  %v636 = vadd.f32 %v604, 1.0
  %v637 = vadd.f32 %v605, 1.0
  %v638 = vadd.f32 %v606, 1.0
  %v639 = vadd.f32 %v607, 1.0
  %v640 = vadd.f32 %v608, 1.0
  %v641 = vadd.f32 %v609, 1.0
  %v642 = vadd.f32 %v610, 1.0
  %v643 = vadd.f32 %v611, 1.0
  %v644 = vadd.f32 %v612, 1.0
  %v645 = vadd.f32 %v613, 1.0
  %v646 = vadd.f32 %v614, 1.0
  %v647 = vadd.f32 %v615, 1.0
  %v648 = vadd.f32 %v616, 1.0
  %v649 = vadd.f32 %v617, 1.0
  %v650 = vadd.f32 %v618, 1.0
  %v651 = vadd.f32 %v619, 1.0
  %v652 = vadd.f32 %v620, 1.0
  %v653 = vadd.f32 %v621, 1.0
  %v654 = vadd.f32 %v622, 1.0
  %v655 = vadd.f32 %v623, 1.0
  %v656 = vadd.f32 %v624, 1.0
  %v657 = vadd.f32 %v625, 1.0
  %v658 = vadd.f32 %v626, 1.0
  %v659 = vmul.f32 %v403, %v627
  %v660 = vmul.f32 %v404, %v628
  %v661 = vmul.f32 %v405, %v629
  %v662 = vmul.f32 %v406, %v630
  %v663 = vmul.f32 %v407, %v631
  %v664 = vmul.f32 %v408, %v632
  %v665 = vmul.f32 %v409, %v633
  %v666 = vmul.f32 %v410, %v634
  %v667 = vmul.f32 %v411, %v635
  %v668 = vmul.f32 %v412, %v636
  %v669 = vmul.f32 %v413, %v637
  %v670 = vmul.f32 %v414, %v638
  %v671 = vmul.f32 %v415, %v639
  %v672 = vmul.f32 %v416, %v640
  %v673 = vmul.f32 %v417, %v641
  %v674 = vmul.f32 %v418, %v642
  %v675 = vmul.f32 %v419, %v643
  %v676 = vmul.f32 %v420, %v644
  %v677 = vmul.f32 %v421, %v645
  %v678 = vmul.f32 %v422, %v646
  %v679 = vmul.f32 %v423, %v647
  %v680 = vmul.f32 %v424, %v648
  %v681 = vmul.f32 %v425, %v649
  %v682 = vmul.f32 %v426, %v650
  %v683 = vmul.f32 %v427, %v651
  %v684 = vmul.f32 %v428, %v652
  %v685 = vmul.f32 %v429, %v653
  %v686 = vmul.f32 %v430, %v654
  %v687 = vmul.f32 %v431, %v655
  %v688 = vmul.f32 %v432, %v656
  %v689 = vmul.f32 %v433, %v657
  %v690 = vmul.f32 %v434, %v658
  %v691 = vld [vmem:[#allocation2] sm:$0xff]
  %v692 = vld [vmem:[#allocation2 + $0x8] sm:$0xff]
  %v693 = vld [vmem:[#allocation2 + $0x10] sm:$0xff]
  %v694 = vld [vmem:[#allocation2 + $0x18] sm:$0xff]
  %v695 = vld [vmem:[#allocation2 + $0x20] sm:$0xff]
  %v696 = vld [vmem:[#allocation2 + $0x28] sm:$0xff]
  %v697 = vld [vmem:[#allocation2 + $0x30] sm:$0xff]
  %v698 = vld [vmem:[#allocation2 + $0x38] sm:$0xff]
  %v699 = vld [vmem:[#allocation2 + $0x40] sm:$0xff]
  %v700 = vld [vmem:[#allocation2 + $0x48] sm:$0xff]
  %v701 = vld [vmem:[#allocation2 + $0x50] sm:$0xff]
  %v702 = vld [vmem:[#allocation2 + $0x58] sm:$0xff]
  %v703 = vld [vmem:[#allocation2 + $0x60] sm:$0xff]
  %v704 = vld [vmem:[#allocation2 + $0x68] sm:$0xff]
  %v705 = vld [vmem:[#allocation2 + $0x70] sm:$0xff]
  %v706 = vld [vmem:[#allocation2 + $0x78] sm:$0xff]
  %v707 = vld [vmem:[#allocation2 + $0x80] sm:$0xff]
  %v708 = vld [vmem:[#allocation2 + $0x88] sm:$0xff]
  %v709 = vld [vmem:[#allocation2 + $0x90] sm:$0xff]
  %v710 = vld [vmem:[#allocation2 + $0x98] sm:$0xff]
  %v711 = vld [vmem:[#allocation2 + $0xa0] sm:$0xff]
  %v712 = vld [vmem:[#allocation2 + $0xa8] sm:$0xff]
  %v713 = vld [vmem:[#allocation2 + $0xb0] sm:$0xff]
  %v714 = vld [vmem:[#allocation2 + $0xb8] sm:$0xff]
  %v715 = vld [vmem:[#allocation2 + $0xc0] sm:$0xff]
  %v716 = vld [vmem:[#allocation2 + $0xc8] sm:$0xff]
  %v717 = vld [vmem:[#allocation2 + $0xd0] sm:$0xff]
  %v718 = vld [vmem:[#allocation2 + $0xd8] sm:$0xff]
  %v719 = vld [vmem:[#allocation2 + $0xe0] sm:$0xff]
  %v720 = vld [vmem:[#allocation2 + $0xe8] sm:$0xff]
  %v721 = vld [vmem:[#allocation2 + $0xf0] sm:$0xff]
  %v722 = vld [vmem:[#allocation2 + $0xf8] sm:$0xff]
  %v723 = vpack.c.bf16 %v660, %v659
  %v724 = vpack.c.bf16 %v662, %v661
  %v725 = vpack.c.bf16 %v664, %v663
  %v726 = vpack.c.bf16 %v666, %v665
  %v727 = vpack.c.bf16 %v668, %v667
  %v728 = vpack.c.bf16 %v670, %v669
  %v729 = vpack.c.bf16 %v672, %v671
  %v730 = vpack.c.bf16 %v674, %v673
  %v731 = vpack.c.bf16 %v676, %v675
  %v732 = vpack.c.bf16 %v678, %v677
  %v733 = vpack.c.bf16 %v680, %v679
  %v734 = vpack.c.bf16 %v682, %v681
  %v735 = vpack.c.bf16 %v684, %v683
  %v736 = vpack.c.bf16 %v686, %v685
  %v737 = vpack.c.bf16 %v688, %v687
  %v738 = vpack.c.bf16 %v690, %v689
  %v739 = vld [vmem:[%s3] sm:$0xf]
  %v740 = vld [vmem:[%s3 + $0x4] sm:$0xf]
  %v741 = vld [vmem:[%s3 + $0x8] sm:$0xf]
  %v742 = vld [vmem:[%s3 + $0xc] sm:$0xf]
  %v743 = vld [vmem:[%s3 + $0x10] sm:$0xf]
  %v744 = vld [vmem:[%s3 + $0x14] sm:$0xf]
  %v745 = vld [vmem:[%s3 + $0x18] sm:$0xf]
  %v746 = vld [vmem:[%s3 + $0x1c] sm:$0xf]
  %v747 = vld [vmem:[%s3 + $0x20] sm:$0xf]
  %v748 = vld [vmem:[%s3 + $0x24] sm:$0xf]
  %v749 = vld [vmem:[%s3 + $0x28] sm:$0xf]
  %v750 = vld [vmem:[%s3 + $0x2c] sm:$0xf]
  %v751 = vld [vmem:[%s3 + $0x30] sm:$0xf]
  %v752 = vld [vmem:[%s3 + $0x34] sm:$0xf]
  %v753 = vld [vmem:[%s3 + $0x38] sm:$0xf]
  %v754 = vld [vmem:[%s3 + $0x3c] sm:$0xf]
  %v771 = vunpack.c.l.b16 %v739
  %v772 = vunpack.c.l.b16 %v740
  %v773 = vunpack.c.l.b16 %v741
  %v774 = vunpack.c.l.b16 %v742
  %v775 = vunpack.c.l.b16 %v743
  %v776 = vunpack.c.l.b16 %v744
  %v777 = vunpack.c.l.b16 %v745
  %v778 = vunpack.c.l.b16 %v746
  %v779 = vunpack.c.l.b16 %v747
  %v780 = vunpack.c.l.b16 %v748
  %v781 = vunpack.c.l.b16 %v749
  %v782 = vunpack.c.l.b16 %v750
  %v783 = vunpack.c.l.b16 %v751
  %v784 = vunpack.c.l.b16 %v752
  %v785 = vunpack.c.l.b16 %v753
  %v786 = vunpack.c.l.b16 %v754
  %v787 = vpack.c.b16 %v772, %v771
  %v788 = vpack.c.b16 %v774, %v773
  %v789 = vpack.c.b16 %v776, %v775
  %v790 = vpack.c.b16 %v778, %v777
  %v791 = vpack.c.b16 %v780, %v779
  %v792 = vpack.c.b16 %v782, %v781
  %v793 = vpack.c.b16 %v784, %v783
  %v794 = vpack.c.b16 %v786, %v785
  %803 = vmatprep.subr.bf16.mxu0 0
  %804 = vmatpush1.bf16.msra.mxu0 %v794
  %805 = vmatprep.subr.bf16.mxu0 0
  %806 = vmatpush1.bf16.msra.mxu0 %v793
  %807 = vmatprep.subr.bf16.mxu0 0
  %808 = vmatpush1.bf16.msra.mxu0 %v792
  %809 = vmatprep.subr.bf16.mxu0 0
  %810 = vmatpush1.bf16.msra.mxu0 %v791
  %811 = vmatprep.subr.bf16.mxu0 0
  %812 = vmatpush1.bf16.msra.mxu0 %v790
  %813 = vmatprep.subr.bf16.mxu0 0
  %814 = vmatpush1.bf16.msra.mxu0 %v789
  %815 = vmatprep.subr.bf16.mxu0 0
  %816 = vmatpush1.bf16.msra.mxu0 %v788
  %817 = vmatprep.subr.bf16.mxu0 0
  %818 = vmatpush1.bf16.msra.mxu0 %v787
  %819 = vmatprep.subr.bf16.mxu0 0
  %820 = vmatpush2.bf16.msra.mxu0 0
  %821 = vmatprep.subr.bf16.mxu0 0
  %822 = vmatpush2.bf16.msra.mxu0 0
  %823 = vmatprep.subr.bf16.mxu0 0
  %824 = vmatpush2.bf16.msra.mxu0 0
  %825 = vmatprep.subr.bf16.mxu0 0
  %826 = vmatpush2.bf16.msra.mxu0 0
  %827 = vmatprep.subr.bf16.mxu0 0
  %828 = vmatpush2.bf16.msra.mxu0 0
  %829 = vmatprep.subr.bf16.mxu0 0
  %830 = vmatpush2.bf16.msra.mxu0 0
  %831 = vmatprep.subr.bf16.mxu0 0
  %832 = vmatpush2.bf16.msra.mxu0 0
  %833 = vmatprep.subr.bf16.mxu0 0
  %834 = vmatpush2.bf16.msra.mxu0 0
  %835 = vmatprep.mubr.bf16.mxu0 0
  %836 = vmatmul.mubr.bf16.gmra.mxu0 %v723
  %v837 = vpop.f32.mrf.mxu0
  %v838 = vadd.f32 0.0, %v837
  %v839 = vpop.f32.mrf.mxu0
  %v840 = vpop.f32.mrf.mxu0
  %v841 = vadd.f32 0.0, %v840
  %v842 = vpop.f32.mrf.mxu0
  %843 = vmatprep.mubr.bf16.mxu0 0
  %844 = vmatmul.mubr.bf16.gmra.mxu0 %v724
  %v845 = vpop.f32.mrf.mxu0
  %v846 = vadd.f32 0.0, %v845
  %v847 = vpop.f32.mrf.mxu0
  %v848 = vpop.f32.mrf.mxu0
  %v849 = vadd.f32 0.0, %v848
  %v850 = vpop.f32.mrf.mxu0
  %851 = vmatprep.mubr.bf16.mxu0 0
  %852 = vmatmul.mubr.bf16.gmra.mxu0 %v725
  %v853 = vpop.f32.mrf.mxu0
  %v854 = vadd.f32 0.0, %v853
  %v855 = vpop.f32.mrf.mxu0
  %v856 = vpop.f32.mrf.mxu0
  %v857 = vadd.f32 0.0, %v856
  %v858 = vpop.f32.mrf.mxu0
  %859 = vmatprep.mubr.bf16.mxu0 0
  %860 = vmatmul.mubr.bf16.gmra.mxu0 %v726
  %v861 = vpop.f32.mrf.mxu0
  %v862 = vadd.f32 0.0, %v861
  %v863 = vpop.f32.mrf.mxu0
  %v864 = vpop.f32.mrf.mxu0
  %v865 = vadd.f32 0.0, %v864
  %v866 = vpop.f32.mrf.mxu0
  %867 = vmatprep.mubr.bf16.mxu0 0
  %868 = vmatmul.mubr.bf16.gmra.mxu0 %v727
  %v869 = vpop.f32.mrf.mxu0
  %v870 = vadd.f32 0.0, %v869
  %v871 = vpop.f32.mrf.mxu0
  %v872 = vpop.f32.mrf.mxu0
  %v873 = vadd.f32 0.0, %v872
  %v874 = vpop.f32.mrf.mxu0
  %875 = vmatprep.mubr.bf16.mxu0 0
  %876 = vmatmul.mubr.bf16.gmra.mxu0 %v728
  %v877 = vpop.f32.mrf.mxu0
  %v878 = vadd.f32 0.0, %v877
  %v879 = vpop.f32.mrf.mxu0
  %v880 = vpop.f32.mrf.mxu0
  %v881 = vadd.f32 0.0, %v880
  %v882 = vpop.f32.mrf.mxu0
  %883 = vmatprep.mubr.bf16.mxu0 0
  %884 = vmatmul.mubr.bf16.gmra.mxu0 %v729
  %v885 = vpop.f32.mrf.mxu0
  %v886 = vadd.f32 0.0, %v885
  %v887 = vpop.f32.mrf.mxu0
  %v888 = vpop.f32.mrf.mxu0
  %v889 = vadd.f32 0.0, %v888
  %v890 = vpop.f32.mrf.mxu0
  %891 = vmatprep.mubr.bf16.mxu0 0
  %892 = vmatmul.mubr.bf16.gmra.mxu0 %v730
  %v893 = vpop.f32.mrf.mxu0
  %v894 = vadd.f32 0.0, %v893
  %v895 = vpop.f32.mrf.mxu0
  %v896 = vpop.f32.mrf.mxu0
  %v897 = vadd.f32 0.0, %v896
  %v898 = vpop.f32.mrf.mxu0
  %899 = vmatprep.mubr.bf16.mxu0 0
  %900 = vmatmul.mubr.bf16.gmra.mxu0 %v731
  %v901 = vpop.f32.mrf.mxu0
  %v902 = vadd.f32 0.0, %v901
  %v903 = vpop.f32.mrf.mxu0
  %v904 = vpop.f32.mrf.mxu0
  %v905 = vadd.f32 0.0, %v904
  %v906 = vpop.f32.mrf.mxu0
  %907 = vmatprep.mubr.bf16.mxu0 0
  %908 = vmatmul.mubr.bf16.gmra.mxu0 %v732
  %v909 = vpop.f32.mrf.mxu0
  %v910 = vadd.f32 0.0, %v909
  %v911 = vpop.f32.mrf.mxu0
  %v912 = vpop.f32.mrf.mxu0
  %v913 = vadd.f32 0.0, %v912
  %v914 = vpop.f32.mrf.mxu0
  %915 = vmatprep.mubr.bf16.mxu0 0
  %916 = vmatmul.mubr.bf16.gmra.mxu0 %v733
  %v917 = vpop.f32.mrf.mxu0
  %v918 = vadd.f32 0.0, %v917
  %v919 = vpop.f32.mrf.mxu0
  %v920 = vpop.f32.mrf.mxu0
  %v921 = vadd.f32 0.0, %v920
  %v922 = vpop.f32.mrf.mxu0
  %923 = vmatprep.mubr.bf16.mxu0 0
  %924 = vmatmul.mubr.bf16.gmra.mxu0 %v734
  %v925 = vpop.f32.mrf.mxu0
  %v926 = vadd.f32 0.0, %v925
  %v927 = vpop.f32.mrf.mxu0
  %v928 = vpop.f32.mrf.mxu0
  %v929 = vadd.f32 0.0, %v928
  %v930 = vpop.f32.mrf.mxu0
  %931 = vmatprep.mubr.bf16.mxu0 0
  %932 = vmatmul.mubr.bf16.gmra.mxu0 %v735
  %v933 = vpop.f32.mrf.mxu0
  %v934 = vadd.f32 0.0, %v933
  %v935 = vpop.f32.mrf.mxu0
  %v936 = vpop.f32.mrf.mxu0
  %v937 = vadd.f32 0.0, %v936
  %v938 = vpop.f32.mrf.mxu0
  %939 = vmatprep.mubr.bf16.mxu0 0
  %940 = vmatmul.mubr.bf16.gmra.mxu0 %v736
  %v941 = vpop.f32.mrf.mxu0
  %v942 = vadd.f32 0.0, %v941
  %v943 = vpop.f32.mrf.mxu0
  %v944 = vpop.f32.mrf.mxu0
  %v945 = vadd.f32 0.0, %v944
  %v946 = vpop.f32.mrf.mxu0
  %947 = vmatprep.mubr.bf16.mxu0 0
  %948 = vmatmul.mubr.bf16.gmra.mxu0 %v737
  %v949 = vpop.f32.mrf.mxu0
  %v950 = vadd.f32 0.0, %v949
  %v951 = vpop.f32.mrf.mxu0
  %v952 = vpop.f32.mrf.mxu0
  %v953 = vadd.f32 0.0, %v952
  %v954 = vpop.f32.mrf.mxu0
  %955 = vmatprep.mubr.bf16.mxu0 0
  %956 = vmatmul.mubr.bf16.gmra.mxu0 %v738
  %v957 = vpop.f32.mrf.mxu0
  %v958 = vadd.f32 0.0, %v957
  %v959 = vpop.f32.mrf.mxu0
  %v960 = vpop.f32.mrf.mxu0
  %v961 = vadd.f32 0.0, %v960
  %v962 = vpop.f32.mrf.mxu0
  %963 = vdwg.mxu0
  %v964 = vadd.f32 %v691, %v838
  %v965 = vadd.f32 %v692, %v841
  %v966 = vadd.f32 %v693, %v846
  %v967 = vadd.f32 %v694, %v849
  %v968 = vadd.f32 %v695, %v854
  %v969 = vadd.f32 %v696, %v857
  %v970 = vadd.f32 %v697, %v862
  %v971 = vadd.f32 %v698, %v865
  %v972 = vadd.f32 %v699, %v870
  %v973 = vadd.f32 %v700, %v873
  %v974 = vadd.f32 %v701, %v878
  %v975 = vadd.f32 %v702, %v881
  %v976 = vadd.f32 %v703, %v886
  %v977 = vadd.f32 %v704, %v889
  %v978 = vadd.f32 %v705, %v894
  %v979 = vadd.f32 %v706, %v897
  %v980 = vadd.f32 %v707, %v902
  %v981 = vadd.f32 %v708, %v905
  %v982 = vadd.f32 %v709, %v910
  %v983 = vadd.f32 %v710, %v913
  %v984 = vadd.f32 %v711, %v918
  %v985 = vadd.f32 %v712, %v921
  %v986 = vadd.f32 %v713, %v926
  %v987 = vadd.f32 %v714, %v929
  %v988 = vadd.f32 %v715, %v934
  %v989 = vadd.f32 %v716, %v937
  %v990 = vadd.f32 %v717, %v942
  %v991 = vadd.f32 %v718, %v945
  %v992 = vadd.f32 %v719, %v950
  %v993 = vadd.f32 %v720, %v953
  %v994 = vadd.f32 %v721, %v958
  %v995 = vadd.f32 %v722, %v961
  %996 = vst.msk [vmem:[#allocation2] sm:$0xff] %vm193, %v964
  %997 = vst.msk [vmem:[#allocation2 + $0x8] sm:$0xff] %vm193, %v965
  %998 = vst.msk [vmem:[#allocation2 + $0x10] sm:$0xff] %vm193, %v966
  %999 = vst.msk [vmem:[#allocation2 + $0x18] sm:$0xff] %vm193, %v967
  %1000 = vst.msk [vmem:[#allocation2 + $0x20] sm:$0xff] %vm193, %v968
  %1001 = vst.msk [vmem:[#allocation2 + $0x28] sm:$0xff] %vm193, %v969
  %1002 = vst.msk [vmem:[#allocation2 + $0x30] sm:$0xff] %vm193, %v970
  %1003 = vst.msk [vmem:[#allocation2 + $0x38] sm:$0xff] %vm193, %v971
  %1004 = vst.msk [vmem:[#allocation2 + $0x40] sm:$0xff] %vm193, %v972
  %1005 = vst.msk [vmem:[#allocation2 + $0x48] sm:$0xff] %vm193, %v973
  %1006 = vst.msk [vmem:[#allocation2 + $0x50] sm:$0xff] %vm193, %v974
  %1007 = vst.msk [vmem:[#allocation2 + $0x58] sm:$0xff] %vm193, %v975
  %1008 = vst.msk [vmem:[#allocation2 + $0x60] sm:$0xff] %vm193, %v976
  %1009 = vst.msk [vmem:[#allocation2 + $0x68] sm:$0xff] %vm193, %v977
  %1010 = vst.msk [vmem:[#allocation2 + $0x70] sm:$0xff] %vm193, %v978
  %1011 = vst.msk [vmem:[#allocation2 + $0x78] sm:$0xff] %vm193, %v979
  %1012 = vst.msk [vmem:[#allocation2 + $0x80] sm:$0xff] %vm193, %v980
  %1013 = vst.msk [vmem:[#allocation2 + $0x88] sm:$0xff] %vm193, %v981
  %1014 = vst.msk [vmem:[#allocation2 + $0x90] sm:$0xff] %vm193, %v982
  %1015 = vst.msk [vmem:[#allocation2 + $0x98] sm:$0xff] %vm193, %v983
  %1016 = vst.msk [vmem:[#allocation2 + $0xa0] sm:$0xff] %vm193, %v984
  %1017 = vst.msk [vmem:[#allocation2 + $0xa8] sm:$0xff] %vm193, %v985
  %1018 = vst.msk [vmem:[#allocation2 + $0xb0] sm:$0xff] %vm193, %v986
  %1019 = vst.msk [vmem:[#allocation2 + $0xb8] sm:$0xff] %vm193, %v987
  %1020 = vst.msk [vmem:[#allocation2 + $0xc0] sm:$0xff] %vm193, %v988
  %1021 = vst.msk [vmem:[#allocation2 + $0xc8] sm:$0xff] %vm193, %v989
  %1022 = vst.msk [vmem:[#allocation2 + $0xd0] sm:$0xff] %vm193, %v990
  %1023 = vst.msk [vmem:[#allocation2 + $0xd8] sm:$0xff] %vm193, %v991
  %1024 = vst.msk [vmem:[#allocation2 + $0xe0] sm:$0xff] %vm193, %v992
  %1025 = vst.msk [vmem:[#allocation2 + $0xe8] sm:$0xff] %vm193, %v993
  %1026 = vst.msk [vmem:[#allocation2 + $0xf0] sm:$0xff] %vm193, %v994
  %1027 = vst.msk [vmem:[#allocation2 + $0xf8] sm:$0xff] %vm193, %v995
  // Predicated region
  $region26: #{tpu_custom_call.1} parent=0 // pred_check
    %p1028 = pneg %p21
  $region27: #{tpu_custom_call.1} parent=0 // pred_check_branch
    %1030 = sbr.rel (%p1028) target = $region29
  $region28: #{tpu_custom_call.1} parent=0 // pred_region
    %v1031 = vld [vmem:[#allocation2] sm:$0xff]
    %v1032 = vld [vmem:[#allocation2 + $0x8] sm:$0xff]
    %v1033 = vld [vmem:[#allocation2 + $0x10] sm:$0xff]
    %v1034 = vld [vmem:[#allocation2 + $0x18] sm:$0xff]
    %v1035 = vld [vmem:[#allocation2 + $0x20] sm:$0xff]
    %v1036 = vld [vmem:[#allocation2 + $0x28] sm:$0xff]
    %v1037 = vld [vmem:[#allocation2 + $0x30] sm:$0xff]
    %v1038 = vld [vmem:[#allocation2 + $0x38] sm:$0xff]
    %v1039 = vld [vmem:[#allocation2 + $0x40] sm:$0xff]
    %v1040 = vld [vmem:[#allocation2 + $0x48] sm:$0xff]
    %v1041 = vld [vmem:[#allocation2 + $0x50] sm:$0xff]
    %v1042 = vld [vmem:[#allocation2 + $0x58] sm:$0xff]
    %v1043 = vld [vmem:[#allocation2 + $0x60] sm:$0xff]
    %v1044 = vld [vmem:[#allocation2 + $0x68] sm:$0xff]
    %v1045 = vld [vmem:[#allocation2 + $0x70] sm:$0xff]
    %v1046 = vld [vmem:[#allocation2 + $0x78] sm:$0xff]
    %v1047 = vld [vmem:[#allocation2 + $0x80] sm:$0xff]
    %v1048 = vld [vmem:[#allocation2 + $0x88] sm:$0xff]
    %v1049 = vld [vmem:[#allocation2 + $0x90] sm:$0xff]
    %v1050 = vld [vmem:[#allocation2 + $0x98] sm:$0xff]
    %v1051 = vld [vmem:[#allocation2 + $0xa0] sm:$0xff]
    %v1052 = vld [vmem:[#allocation2 + $0xa8] sm:$0xff]
    %v1053 = vld [vmem:[#allocation2 + $0xb0] sm:$0xff]
    %v1054 = vld [vmem:[#allocation2 + $0xb8] sm:$0xff]
    %v1055 = vld [vmem:[#allocation2 + $0xc0] sm:$0xff]
    %v1056 = vld [vmem:[#allocation2 + $0xc8] sm:$0xff]
    %v1057 = vld [vmem:[#allocation2 + $0xd0] sm:$0xff]
    %v1058 = vld [vmem:[#allocation2 + $0xd8] sm:$0xff]
    %v1059 = vld [vmem:[#allocation2 + $0xe0] sm:$0xff]
    %v1060 = vld [vmem:[#allocation2 + $0xe8] sm:$0xff]
    %v1061 = vld [vmem:[#allocation2 + $0xf0] sm:$0xff]
    %v1062 = vld [vmem:[#allocation2 + $0xf8] sm:$0xff]
    %v1063 = vld [vmem:[%s4] sm:$0x1]
    %v1065 = vlaneseq
    %v1066 = vshrl.u32 %v1065, 7
    %v1067 = vsub.s32 0, %v1066
    %v1068 = vrot.slane %v1063, %v1067
    %v1070 = vadd.f32 %v1031, %v1068
    %v1071 = vadd.f32 %v1032, %v1068
    %v1072 = vadd.f32 %v1033, %v1068
    %v1073 = vadd.f32 %v1034, %v1068
    %v1074 = vadd.f32 %v1035, %v1068
    %v1075 = vadd.f32 %v1036, %v1068
    %v1076 = vadd.f32 %v1037, %v1068
    %v1077 = vadd.f32 %v1038, %v1068
    %v1078 = vadd.f32 %v1039, %v1068
    %v1079 = vadd.f32 %v1040, %v1068
    %v1080 = vadd.f32 %v1041, %v1068
    %v1081 = vadd.f32 %v1042, %v1068
    %v1082 = vadd.f32 %v1043, %v1068
    %v1083 = vadd.f32 %v1044, %v1068
    %v1084 = vadd.f32 %v1045, %v1068
    %v1085 = vadd.f32 %v1046, %v1068
    %v1086 = vadd.f32 %v1047, %v1068
    %v1087 = vadd.f32 %v1048, %v1068
    %v1088 = vadd.f32 %v1049, %v1068
    %v1089 = vadd.f32 %v1050, %v1068
    %v1090 = vadd.f32 %v1051, %v1068
    %v1091 = vadd.f32 %v1052, %v1068
    %v1092 = vadd.f32 %v1053, %v1068
    %v1093 = vadd.f32 %v1054, %v1068
    %v1094 = vadd.f32 %v1055, %v1068
    %v1095 = vadd.f32 %v1056, %v1068
    %v1096 = vadd.f32 %v1057, %v1068
    %v1097 = vadd.f32 %v1058, %v1068
    %v1098 = vadd.f32 %v1059, %v1068
    %v1099 = vadd.f32 %v1060, %v1068
    %v1100 = vadd.f32 %v1061, %v1068
    %v1101 = vadd.f32 %v1062, %v1068
    %1102 = vst.msk [vmem:[%s5] sm:$0xff] %vm193, %v1070
    %1103 = vst.msk [vmem:[%s5 + $0x8] sm:$0xff] %vm193, %v1071
    %1104 = vst.msk [vmem:[%s5 + $0x10] sm:$0xff] %vm193, %v1072
    %1105 = vst.msk [vmem:[%s5 + $0x18] sm:$0xff] %vm193, %v1073
    %1106 = vst.msk [vmem:[%s5 + $0x20] sm:$0xff] %vm193, %v1074
    %1107 = vst.msk [vmem:[%s5 + $0x28] sm:$0xff] %vm193, %v1075
    %1108 = vst.msk [vmem:[%s5 + $0x30] sm:$0xff] %vm193, %v1076
    %1109 = vst.msk [vmem:[%s5 + $0x38] sm:$0xff] %vm193, %v1077
    %1110 = vst.msk [vmem:[%s5 + $0x40] sm:$0xff] %vm193, %v1078
    %1111 = vst.msk [vmem:[%s5 + $0x48] sm:$0xff] %vm193, %v1079
    %1112 = vst.msk [vmem:[%s5 + $0x50] sm:$0xff] %vm193, %v1080
    %1113 = vst.msk [vmem:[%s5 + $0x58] sm:$0xff] %vm193, %v1081
    %1114 = vst.msk [vmem:[%s5 + $0x60] sm:$0xff] %vm193, %v1082
    %1115 = vst.msk [vmem:[%s5 + $0x68] sm:$0xff] %vm193, %v1083
    %1116 = vst.msk [vmem:[%s5 + $0x70] sm:$0xff] %vm193, %v1084
    %1117 = vst.msk [vmem:[%s5 + $0x78] sm:$0xff] %vm193, %v1085
    %1118 = vst.msk [vmem:[%s5 + $0x80] sm:$0xff] %vm193, %v1086
    %1119 = vst.msk [vmem:[%s5 + $0x88] sm:$0xff] %vm193, %v1087
    %1120 = vst.msk [vmem:[%s5 + $0x90] sm:$0xff] %vm193, %v1088
    %1121 = vst.msk [vmem:[%s5 + $0x98] sm:$0xff] %vm193, %v1089
    %1122 = vst.msk [vmem:[%s5 + $0xa0] sm:$0xff] %vm193, %v1090
    %1123 = vst.msk [vmem:[%s5 + $0xa8] sm:$0xff] %vm193, %v1091
    %1124 = vst.msk [vmem:[%s5 + $0xb0] sm:$0xff] %vm193, %v1092
    %1125 = vst.msk [vmem:[%s5 + $0xb8] sm:$0xff] %vm193, %v1093
    %1126 = vst.msk [vmem:[%s5 + $0xc0] sm:$0xff] %vm193, %v1094
    %1127 = vst.msk [vmem:[%s5 + $0xc8] sm:$0xff] %vm193, %v1095
    %1128 = vst.msk [vmem:[%s5 + $0xd0] sm:$0xff] %vm193, %v1096
    %1129 = vst.msk [vmem:[%s5 + $0xd8] sm:$0xff] %vm193, %v1097
    %1130 = vst.msk [vmem:[%s5 + $0xe0] sm:$0xff] %vm193, %v1098
    %1131 = vst.msk [vmem:[%s5 + $0xe8] sm:$0xff] %vm193, %v1099
    %1132 = vst.msk [vmem:[%s5 + $0xf0] sm:$0xff] %vm193, %v1100
    %1133 = vst.msk [vmem:[%s5 + $0xf8] sm:$0xff] %vm193, %v1101
  $region29: #{tpu_custom_call.1} parent=0 // pred_fallthru
    _
  // Predicated region
  $region30: #{tpu_custom_call.1} parent=0 // pred_check
    _
  $region31: #{tpu_custom_call.1} parent=0 // pred_check_branch
    %1135 = sbr.rel (0) target = $region33
  $region32: #{tpu_custom_call.1} parent=0 // pred_region
    _
  $region33: #{tpu_custom_call.1} parent=0 // pred_fallthru
    _
  // Predicated region
  $region34: #{tpu_custom_call.1} parent=0 // pred_check
    _
  $region35: #{tpu_custom_call.1} parent=0 // pred_check_branch
    %1137 = sbr.rel (0) target = $region37
  $region36: #{tpu_custom_call.1} parent=0 // pred_region
    _
  $region37: #{tpu_custom_call.1} parent=0 // pred_fallthru
    _

</llo_original>
